<compile_context>
chip_gen: v5e
topology: v5e:2x2
jax: 0.10.0
libtpu: 0.0.40
codegen_flags: <defaults>
</compile_context>

<pallas_src>
import jax
import jax.numpy as jnp
from jax.experimental import pallas as pl
from jax.experimental.pallas import tpu as pltpu

HIDDEN = 100   # "hundred wide"
LANE = 128
SUBLANE = 8


def _round_up(v, m):
    return (v + m - 1) // m * m


def _mlp_kernel(x_ref, w1_ref, b1_ref, w2_ref, b2_ref, o_ref):
    # One batch tile per grid step; both matmuls + ReLU fused, f32 accumulation.
    x = x_ref[...]
    h = jnp.dot(x, w1_ref[...], preferred_element_type=jnp.float32)
    h = jnp.maximum(h + b1_ref[...], 0.0)
    y = jnp.dot(h, w2_ref[...], preferred_element_type=jnp.float32)
    o_ref[...] = (y + b2_ref[...]).astype(o_ref.dtype)


def prepare_params(params):
    """torch-style (out,in)/(out,) params -> transposed, lane-padded kernel params."""
    w1, b1, w2, b2 = params
    len_feat = w1.shape[1]
    hidden = w1.shape[0]
    len_target = w2.shape[0]
    hidden_p = _round_up(hidden, LANE)       # 100 -> 128
    out_p = _round_up(len_target, LANE)      # len_target -> 128

    w1_t = jnp.zeros((len_feat, hidden_p), jnp.float32).at[:, :hidden].set(w1.T)
    b1_p = jnp.zeros((1, hidden_p), jnp.float32).at[0, :hidden].set(b1)
    w2_t = jnp.zeros((hidden_p, out_p), jnp.float32).at[:hidden, :len_target].set(w2.T)
    b2_p = jnp.zeros((1, out_p), jnp.float32).at[0, :len_target].set(b2)
    return (w1_t, b1_p, w2_t, b2_p)


def fc_one_deep_hundred_wide(x, prepared, len_target, *, tb=512):
    """Forward pass of FC_one_deep_hundred_wide as one batch-tiled pallas_call."""
    w1_t, b1_p, w2_t, b2_p = prepared
    batch, len_feat = x.shape
    hidden_p = w1_t.shape[1]
    out_p = w2_t.shape[1]

    # Batch tile: multiple of 8 sublanes, capped so 2x(in+out) tiles + weights stay
    # well under the 16/32 MiB scoped-VMEM defaults on every generation (incl. v7x).
    tb = min(tb, _round_up(batch, SUBLANE))
    batch_p = _round_up(batch, tb)
    if batch_p != batch:
        x = jnp.pad(x, ((0, batch_p - batch), (0, 0)))

    grid = (batch_p // tb,)

    # Weights/biases: full-array blocks, index_map always block 0 -> VMEM-resident.
    resident = lambda a: pl.BlockSpec(a.shape, lambda i: (0,) * a.ndim)

    flops = 2 * batch_p * (len_feat * hidden_p + hidden_p * out_p)
    bytes_accessed = 4 * (batch_p * (len_feat + out_p)
                          + w1_t.size + b1_p.size + w2_t.size + b2_p.size)

    y_p = pl.pallas_call(
        _mlp_kernel,
        out_shape=jax.ShapeDtypeStruct((batch_p, out_p), x.dtype),
        grid=grid,
        in_specs=[
            pl.BlockSpec((tb, len_feat), lambda i: (i, 0)),   # batch-tiled input
            resident(w1_t), resident(b1_p),
            resident(w2_t), resident(b2_p),
        ],
        out_specs=pl.BlockSpec((tb, out_p), lambda i: (i, 0)),  # lane-dense output
        compiler_params=pltpu.CompilerParams(
            dimension_semantics=("parallel",)),
        cost_estimate=pl.CostEstimate(
            flops=flops, transcendentals=0, bytes_accessed=bytes_accessed),
    )(x, w1_t, b1_p, w2_t, b2_p)

    # Strip batch/lane padding (padded columns are exactly zero by construction).
    return y_p[:batch, :len_target]


def init_params(key, len_feat, len_target):
    """Deterministic init mirroring torch.nn.Linear shapes (out_features, in_features)."""
    ks = jax.random.split(key, 4)

    def linear_init(kw, kb, fan_in, fan_out):
        bound = 1.0 / jnp.sqrt(fan_in)
        w = jax.random.uniform(kw, (fan_out, fan_in), jnp.float32, -bound, bound)
        b = jax.random.uniform(kb, (fan_out,), jnp.float32, -bound, bound)
        return w, b

    w1, b1 = linear_init(ks[0], ks[1], len_feat, HIDDEN)
    w2, b2 = linear_init(ks[2], ks[3], HIDDEN, len_target)
    return (w1, b1, w2, b2)


def reference_forward(x, params):
    w1, b1, w2, b2 = params
    h = jnp.maximum(x @ w1.T + b1, 0.0)
    return h @ w2.T + b2


if __name__ == "__main__":
    key = jax.random.PRNGKey(0)
    k_x, k_p = jax.random.split(key)

    batch, len_feat, len_target = 16, 32, 4
    x = jax.random.normal(k_x, (batch, len_feat), jnp.float32)
    params = init_params(k_p, len_feat, len_target)

    prepared = prepare_params(params)
    out = fc_one_deep_hundred_wide(x, prepared, len_target)
    out = jax.block_until_ready(out)

    ref = reference_forward(x, params)
    assert out.shape == (batch, len_target)
    assert jnp.allclose(out, ref, atol=1e-5, rtol=1e-5)

    print("KERNEL_OK")
</pallas_src>

<mosaic_0001>
module attributes {stable_mosaic.version = 11 : i64} {
  func.func @_mlp_kernel(%arg0: i32, %arg1: memref<16x32xf32, #tpu.memory_space<vmem>>, %arg2: memref<32x128xf32, #tpu.memory_space<vmem>>, %arg3: memref<1x128xf32, #tpu.memory_space<vmem>>, %arg4: memref<128x128xf32, #tpu.memory_space<vmem>>, %arg5: memref<1x128xf32, #tpu.memory_space<vmem>>, %arg6: memref<16x128xf32, #tpu.memory_space<vmem>>) attributes {dimension_semantics = [#tpu.dimension_semantics<parallel>], iteration_bounds = array<i64: 1>, scalar_prefetch = 0 : i64, scratch_operands = 0 : i64, tpu.core_type = #tpu.core_type<tc>, window_params = [{transform_indices = @transform_0, window_bounds = array<i64: 16, 32>}, {pipeline_mode = #tpu.pipeline_mode<synchronous>, transform_indices = @transform_1, window_bounds = array<i64: 32, 128>}, {pipeline_mode = #tpu.pipeline_mode<synchronous>, transform_indices = @transform_2, window_bounds = array<i64: 1, 128>}, {pipeline_mode = #tpu.pipeline_mode<synchronous>, transform_indices = @transform_3, window_bounds = array<i64: 128, 128>}, {pipeline_mode = #tpu.pipeline_mode<synchronous>, transform_indices = @transform_4, window_bounds = array<i64: 1, 128>}, {transform_indices = @transform_5, window_bounds = array<i64: 16, 128>}]} {
    %c0 = arith.constant 0 : index
    %c0_0 = arith.constant 0 : index
    %0 = vector.load %arg1[%c0, %c0_0] : memref<16x32xf32, #tpu.memory_space<vmem>>, vector<16x32xf32>
    %c0_1 = arith.constant 0 : index
    %c0_2 = arith.constant 0 : index
    %1 = vector.load %arg2[%c0_1, %c0_2] : memref<32x128xf32, #tpu.memory_space<vmem>>, vector<32x128xf32>
    %cst = arith.constant dense<0.000000e+00> : vector<16x128xf32>
    %2 = tpu.matmul %0, %1, %cst {dimension_numbers = #tpu.dot_dimension_numbers<[1], [0], [0], [1], [0, 0, 1, 1], [], []>} : vector<16x32xf32>, vector<32x128xf32>, vector<16x128xf32> -> vector<16x128xf32>
    %c0_3 = arith.constant 0 : index
    %c0_4 = arith.constant 0 : index
    %3 = vector.load %arg3[%c0_3, %c0_4] : memref<1x128xf32, #tpu.memory_space<vmem>>, vector<1x128xf32>
    %4 = vector.broadcast %3 : vector<1x128xf32> to vector<16x128xf32>
    %5 = arith.addf %2, %4 : vector<16x128xf32>
    %cst_5 = arith.constant 0.000000e+00 : f32
    %6 = vector.broadcast %cst_5 : f32 to vector<16x128xf32>
    %7 = arith.maximumf %5, %6 : vector<16x128xf32>
    %c0_6 = arith.constant 0 : index
    %c0_7 = arith.constant 0 : index
    %8 = vector.load %arg4[%c0_6, %c0_7] : memref<128x128xf32, #tpu.memory_space<vmem>>, vector<128x128xf32>
    %cst_8 = arith.constant dense<0.000000e+00> : vector<16x128xf32>
    %9 = tpu.matmul %7, %8, %cst_8 {dimension_numbers = #tpu.dot_dimension_numbers<[1], [0], [0], [1], [0, 0, 1, 1], [], []>} : vector<16x128xf32>, vector<128x128xf32>, vector<16x128xf32> -> vector<16x128xf32>
    %c0_9 = arith.constant 0 : index
    %c0_10 = arith.constant 0 : index
    %10 = vector.load %arg5[%c0_9, %c0_10] : memref<1x128xf32, #tpu.memory_space<vmem>>, vector<1x128xf32>
    %11 = vector.broadcast %10 : vector<1x128xf32> to vector<16x128xf32>
    %12 = arith.addf %9, %11 : vector<16x128xf32>
    %c0_11 = arith.constant 0 : index
    %c0_12 = arith.constant 0 : index
    %13 = vector.load %arg6[%c0_11, %c0_12] : memref<16x128xf32, #tpu.memory_space<vmem>>, vector<16x128xf32>
    tpu.vector_store %arg6[%c0_11, %c0_12], %12 {strides = array<i32>} : memref<16x128xf32, #tpu.memory_space<vmem>>, vector<16x128xf32>,
    return
  }
  func.func @transform_0(%arg0: i32) -> (i32, i32) {
    %c0_i32 = arith.constant 0 : i32
    %c0_i32_0 = arith.constant 0 : i32
    return %arg0, %c0_i32 : i32, i32
  }
  func.func @transform_1(%arg0: i32) -> (i32, i32) {
    %c0_i32 = arith.constant 0 : i32
    %c0_i32_0 = arith.constant 0 : i32
    %c0_i32_1 = arith.constant 0 : i32
    return %c0_i32, %c0_i32_0 : i32, i32
  }
  func.func @transform_2(%arg0: i32) -> (i32, i32) {
    %c0_i32 = arith.constant 0 : i32
    %c0_i32_0 = arith.constant 0 : i32
    %c0_i32_1 = arith.constant 0 : i32
    return %c0_i32, %c0_i32_0 : i32, i32
  }
  func.func @transform_3(%arg0: i32) -> (i32, i32) {
    %c0_i32 = arith.constant 0 : i32
    %c0_i32_0 = arith.constant 0 : i32
    %c0_i32_1 = arith.constant 0 : i32
    return %c0_i32, %c0_i32_0 : i32, i32
  }
  func.func @transform_4(%arg0: i32) -> (i32, i32) {
    %c0_i32 = arith.constant 0 : i32
    %c0_i32_0 = arith.constant 0 : i32
    %c0_i32_1 = arith.constant 0 : i32
    return %c0_i32, %c0_i32_0 : i32, i32
  }
  func.func @transform_5(%arg0: i32) -> (i32, i32) {
    %c0_i32 = arith.constant 0 : i32
    %c0_i32_0 = arith.constant 0 : i32
    return %arg0, %c0_i32 : i32, i32
  }
}

</mosaic_0001>

<llo_original>
// kernel: tpu_custom_call.1
$region0: #{tpu_custom_call.1}
  #allocation0 [shape = 'u32[]', space=smem, size = 0x4, offset = 0x4, fixed_abs, tag = 'smem constant byte address 0x4 - core index']
  #allocation1 [shape = 'u32[72,128]{1,0:T(1,128)}', space=vmem, size = 0x9000, scoped, tag = 'internal scratch']
  %s0 = inlined_call_operand.hbm [shape: f32[16,32], index: 0, kind: input, shape index: {}]
  %s1 = inlined_call_operand.hbm [shape: f32[32,128], index: 1, kind: input, shape index: {}]
  %s2 = inlined_call_operand.vmem [shape: f32[1,128], index: 2, kind: input, shape index: {}]
  %s3 = inlined_call_operand.hbm [shape: f32[128,128], index: 3, kind: input, shape index: {}]
  %s4 = inlined_call_operand.vmem [shape: f32[1,128], index: 4, kind: input, shape index: {}]
  %s5 = inlined_call_operand.hbm [shape: f32[16,128], index: 5, kind: output, shape index: {}]
  %s6 = sld [smem:[#allocation0]]
  $region42: #{tpu_custom_call.1} parent=0
    _
  %s8 = ssub.s32 1, %s6
  %s9 = scalar_select 0, %s8, %s6
  $region1: #{tpu_custom_call.1} parent=0
    #allocation2 [shape = 'u8[8192]{0}', space=vmem, size = 0x2000, scoped, tag = 'input window, operand 0, single buffered']
    #allocation3 [shape = 's32[1]{0}', space=sflag, size = 0x4, scoped, tag = 'scoped memory for tpu_custom_call.1']
    #allocation4 [shape = 's32[1]{0}', space=sflag, size = 0x4, scoped, tag = 'scoped memory for tpu_custom_call.1']
    #allocation5 [shape = 'u8[16384]{0}', space=vmem, size = 0x4000, scoped, tag = 'input window, operand 1, single buffered']
    #allocation6 [shape = 's32[1]{0}', space=sflag, size = 0x4, scoped, tag = 'scoped memory for tpu_custom_call.1']
    #allocation7 [shape = 'u8[65536]{0}', space=vmem, size = 0x10000, scoped, tag = 'input window, operand 3, single buffered']
    #allocation8 [shape = 'u8[8192]{0}', space=vmem, size = 0x2000, scoped, tag = 'output window, operand 0, single buffered']
    %10 = vsyncpa [#allocation3], 0
    %11 = vsyncpa [#allocation6], 0
    %12 = vsyncpa [#allocation4], 0
    // Predicated region
    $region2: #{tpu_custom_call.1} parent=1 // pred_check
      _
    $region3: #{tpu_custom_call.1} parent=1 // pred_check_branch
      %14 = sbr.rel (0) target = $region5
    $region4: #{tpu_custom_call.1} parent=1 // pred_region
      %16 = vsyncadd [#allocation3], 0
      %s17 = sshll.u32 %s0, 4
      %s18 = int_to_ptr.hbm [resolvable:$true] %s17
      %s19 = sshll.u32 [#allocation2], 4
      %s20 = int_to_ptr.vmem [resolvable:$true] %s19
      %25 = dma.hbm_to_vmem [thread:$0]  %s18, 256, %s20, [#allocation3], 128, 128, 8
    $region5: #{tpu_custom_call.1} parent=1 // pred_fallthru
      _
    // Predicated region
    $region6: #{tpu_custom_call.1} parent=1 // pred_check
      _
    $region7: #{tpu_custom_call.1} parent=1 // pred_check_branch
      %27 = sbr.rel (0) target = $region9
    $region8: #{tpu_custom_call.1} parent=1 // pred_region
      %29 = vsyncadd [#allocation6], 0
      %s30 = sshll.u32 %s1, 4
      %s31 = int_to_ptr.hbm [resolvable:$true] %s30
      %s32 = sshll.u32 [#allocation5], 4
      %s33 = int_to_ptr.vmem [resolvable:$true] %s32
      %38 = dma.hbm_to_vmem [thread:$0]  %s31, 512, %s33, [#allocation6], 128, 128, 8
    $region9: #{tpu_custom_call.1} parent=1 // pred_fallthru
      _
    // Predicated region
    $region10: #{tpu_custom_call.1} parent=1 // pred_check
      _
    $region11: #{tpu_custom_call.1} parent=1 // pred_check_branch
      %40 = sbr.rel (0) target = $region13
    $region12: #{tpu_custom_call.1} parent=1 // pred_region
      _
    $region13: #{tpu_custom_call.1} parent=1 // pred_fallthru
      _
    // Predicated region
    $region14: #{tpu_custom_call.1} parent=1 // pred_check
      _
    $region15: #{tpu_custom_call.1} parent=1 // pred_check_branch
      %42 = sbr.rel (0) target = $region17
    $region16: #{tpu_custom_call.1} parent=1 // pred_region
      %44 = vsyncadd [#allocation6], 0
      %s45 = sshll.u32 %s3, 4
      %s46 = int_to_ptr.hbm [resolvable:$true] %s45
      %s47 = sshll.u32 [#allocation7], 4
      %s48 = int_to_ptr.vmem [resolvable:$true] %s47
      %53 = dma.hbm_to_vmem [thread:$0]  %s46, 2048, %s48, [#allocation6], 128, 128, 8
    $region17: #{tpu_custom_call.1} parent=1 // pred_fallthru
      _
    // Predicated region
    $region18: #{tpu_custom_call.1} parent=1 // pred_check
      _
    $region19: #{tpu_custom_call.1} parent=1 // pred_check_branch
      %55 = sbr.rel (0) target = $region21
    $region20: #{tpu_custom_call.1} parent=1 // pred_region
      _
    $region21: #{tpu_custom_call.1} parent=1 // pred_fallthru
      _
    // Predicated region
    $region22: #{tpu_custom_call.1} parent=1 // pred_check
      _
    $region23: #{tpu_custom_call.1} parent=1 // pred_check_branch
      %57 = sbr.rel (0) target = $region25
    $region24: #{tpu_custom_call.1} parent=1 // pred_region
      %59 = dma.done [#allocation3], 256
    $region25: #{tpu_custom_call.1} parent=1 // pred_fallthru
      _
    // Predicated region
    $region26: #{tpu_custom_call.1} parent=1 // pred_check
      _
    $region27: #{tpu_custom_call.1} parent=1 // pred_check_branch
      %61 = sbr.rel (0) target = $region29
    $region28: #{tpu_custom_call.1} parent=1 // pred_region
      %63 = dma.done [#allocation6], 512
    $region29: #{tpu_custom_call.1} parent=1 // pred_fallthru
      _
    // Predicated region
    $region30: #{tpu_custom_call.1} parent=1 // pred_check
      _
    $region31: #{tpu_custom_call.1} parent=1 // pred_check_branch
      %65 = sbr.rel (0) target = $region33
    $region32: #{tpu_custom_call.1} parent=1 // pred_region
      %67 = dma.done [#allocation6], 2048
    $region33: #{tpu_custom_call.1} parent=1 // pred_fallthru
      _
    %v68 = vld [vmem:[#allocation2] sm:$0xff]
    %v69 = vld [vmem:[#allocation2 + $0x8] sm:$0xff]
    %v70 = vld [vmem:[#allocation5] sm:$0xff]
    %v71 = vld [vmem:[#allocation5 + $0x8] sm:$0xff]
    %v72 = vld [vmem:[#allocation5 + $0x10] sm:$0xff]
    %v73 = vld [vmem:[#allocation5 + $0x18] sm:$0xff]
    %v74 = vld [vmem:[%s2] sm:$0x1]
    %v76 = vperm.slane %v74, 0
    %vm78 = vcmask 261120
    %v80 = vsel %vm78, %v68, 0
    %v83 = vsel %vm78, %v69, 0
    %85 = vmatpush.msra.mxu0 0.0
    %86 = vmatpush.msra.mxu0 0.0
    %87 = vmatpush.msra.mxu0 0.0
    %88 = vmatpush.msra.mxu0 0.0
    %89 = vmatpush.msra.mxu0 0.0
    %90 = vmatpush.msra.mxu0 0.0
    %91 = vmatpush.msra.mxu0 0.0
    %92 = vmatpush.msra.mxu0 0.0
    %93 = vmatpush.msra.mxu0 0.0
    %94 = vmatpush.msra.mxu0 0.0
    %95 = vmatpush.msra.mxu0 0.0
    %96 = vmatpush.msra.mxu0 0.0
    %97 = vmatpush.msra.mxu0 %v73
    %98 = vmatpush.msra.mxu0 %v72
    %99 = vmatpush.msra.mxu0 %v71
    %100 = vmatpush.msra.mxu0 %v70
    %101 = vmatmul.f32.gmra.mxu0 %v80
    %v102 = vpop.f32.mrf.mxu0
    %v103 = vadd.f32 %v76, %v102
    %104 = vmatmul.f32.gmra.mxu0 %v83
    %v105 = vpop.f32.mrf.mxu0
    %v106 = vadd.f32 %v76, %v105
    %107 = vdwg.mxu0
    %v108 = vmax.f32 %v103, 0.0
    %v109 = vmax.f32 %v106, 0.0
    %v110 = vld [vmem:[#allocation7] sm:$0xff]
    %v111 = vld [vmem:[#allocation7 + $0x8] sm:$0xff]
    %v112 = vld [vmem:[#allocation7 + $0x10] sm:$0xff]
    %v113 = vld [vmem:[#allocation7 + $0x18] sm:$0xff]
    %v114 = vld [vmem:[#allocation7 + $0x20] sm:$0xff]
    %v115 = vld [vmem:[#allocation7 + $0x28] sm:$0xff]
    %v116 = vld [vmem:[#allocation7 + $0x30] sm:$0xff]
    %v117 = vld [vmem:[#allocation7 + $0x38] sm:$0xff]
    %v118 = vld [vmem:[#allocation7 + $0x40] sm:$0xff]
    %v119 = vld [vmem:[#allocation7 + $0x48] sm:$0xff]
    %v120 = vld [vmem:[#allocation7 + $0x50] sm:$0xff]
    %v121 = vld [vmem:[#allocation7 + $0x58] sm:$0xff]
    %v122 = vld [vmem:[#allocation7 + $0x60] sm:$0xff]
    %v123 = vld [vmem:[#allocation7 + $0x68] sm:$0xff]
    %v124 = vld [vmem:[#allocation7 + $0x70] sm:$0xff]
    %v125 = vld [vmem:[#allocation7 + $0x78] sm:$0xff]
    %v126 = vld [vmem:[%s4] sm:$0x1]
    %v128 = vperm.slane %v126, 0
    %130 = vmatpush.msra.mxu0 %v125
    %131 = vmatpush.msra.mxu0 %v124
    %132 = vmatpush.msra.mxu0 %v123
    %133 = vmatpush.msra.mxu0 %v122
    %134 = vmatpush.msra.mxu0 %v121
    %135 = vmatpush.msra.mxu0 %v120
    %136 = vmatpush.msra.mxu0 %v119
    %137 = vmatpush.msra.mxu0 %v118
    %138 = vmatpush.msra.mxu0 %v117
    %139 = vmatpush.msra.mxu0 %v116
    %140 = vmatpush.msra.mxu0 %v115
    %141 = vmatpush.msra.mxu0 %v114
    %142 = vmatpush.msra.mxu0 %v113
    %143 = vmatpush.msra.mxu0 %v112
    %144 = vmatpush.msra.mxu0 %v111
    %145 = vmatpush.msra.mxu0 %v110
    %146 = vmatmul.f32.gmra.mxu0 %v108
    %v147 = vpop.f32.mrf.mxu0
    %v148 = vadd.f32 %v128, %v147
    %149 = vmatmul.f32.gmra.mxu0 %v109
    %v150 = vpop.f32.mrf.mxu0
    %v151 = vadd.f32 %v128, %v150
    %152 = vdwg.mxu0
    %153 = vst [vmem:[#allocation8] sm:$0xff] %v148
    %154 = vst [vmem:[#allocation8 + $0x8] sm:$0xff] %v151
    // Predicated region
    $region34: #{tpu_custom_call.1} parent=1 // pred_check
      _
    $region35: #{tpu_custom_call.1} parent=1 // pred_check_branch
      %156 = sbr.rel (0) target = $region37
    $region36: #{tpu_custom_call.1} parent=1 // pred_region
      %158 = vsyncadd [#allocation4], 0
      %s159 = sshll.u32 [#allocation8], 4
      %s160 = int_to_ptr.vmem [resolvable:$true] %s159
      %s161 = sshll.u32 %s5, 4
      %s162 = int_to_ptr.hbm [resolvable:$true] %s161
      %167 = dma.vmem_to_hbm [thread:$0]  %s160, 256, %s162, [#allocation4], 128, 128, 8
    $region37: #{tpu_custom_call.1} parent=1 // pred_fallthru
      _
    // Predicated region
    $region38: #{tpu_custom_call.1} parent=1 // pred_check
      _
    $region39: #{tpu_custom_call.1} parent=1 // pred_check_branch
      %169 = sbr.rel (0) target = $region41
    $region40: #{tpu_custom_call.1} parent=1 // pred_region
      %171 = dma.done [#allocation4], 256
    $region41: #{tpu_custom_call.1} parent=1 // pred_fallthru
      _
    %172 = vsyncpa [#allocation3], 1
    %173 = vsyncpa [#allocation6], 1
    %174 = vsyncpa [#allocation4], 1

</llo_original>
